<compile_context>
chip_gen: v5e
topology: v5e:2x2
jax: 0.10.0
libtpu: 0.0.40
codegen_flags: <defaults>
</compile_context>

<pallas_src>
import functools

import jax
import jax.numpy as jnp
from jax.experimental import pallas as pl
from jax.experimental.pallas import tpu as pltpu


def _affinity_kernel(ge_ref, gvt_ref, scale_ref, out_ref, *, n_heads, slope):
    # ge_ref:    [TM, H*D]  bf16   edge projection rows
    # gvt_ref:   [H*D, TN]  bf16   vertex projection, pre-transposed (nodes on lanes)
    # scale_ref: [H, H*D]   bf16   scale[j, i*D + d] = W_attn[j, i]
    # out_ref:   [TM, TN]
    ge = ge_ref[...]
    gvt = gvt_ref[...]
    sc = scale_ref[...]

    acc = jnp.zeros(out_ref.shape, jnp.float32)
    for j in range(n_heads):                       # H is small and static -> unrolled
        # Fold the attention head-mix for output head j into the contraction:
        # (ge * scale[j]) @ gvt contracts over K = H*D on the MXU.
        ge_j = ge * sc[j:j + 1, :]                 # [TM, H*D] broadcast multiply
        a = jnp.dot(ge_j, gvt, preferred_element_type=jnp.float32)   # [TM, TN]
        acc = acc + jnp.maximum(a, slope * a)      # LeakyReLU (0 < slope < 1)
    out_ref[...] = acc.astype(out_ref.dtype)


def affinity_layer_cora(vertex, edge, w_vert, w_edge, w_attn,
                        *, n_heads, n_hidden, slope=0.2,
                        tile_edges=512, tile_nodes=512):
    """vertex: [n_nodes, F], edge: [n_edges, F].
    w_vert/w_edge: [H*D, F] (PyTorch nn.Linear layout), w_attn: [H, H].
    Returns e: [n_edges, n_nodes] (assumes n_heads > 1, matching the squeeze no-op)."""
    n_nodes, f = vertex.shape
    n_edges, _ = edge.shape
    hd = n_heads * n_hidden

    # --- hoisted prologue (glue, runs once in XLA, not per grid point) ----------
    g_edge = jnp.dot(edge, w_edge.T)                     # [n_edges, H*D]
    g_vert_t = jnp.dot(vertex, w_vert.T).T               # [H*D, n_nodes], lane-dense on nodes

    # bf16 MXU operands; accumulation stays f32 inside the kernel.
    g_edge = g_edge.astype(jnp.bfloat16)
    g_vert_t = g_vert_t.astype(jnp.bfloat16)

    # Per-column head-mix table: scale[j, i*D + d] = w_attn[j, i].
    scale = jnp.repeat(w_attn, n_hidden, axis=1).astype(jnp.bfloat16)   # [H, H*D]
    # ----------------------------------------------------------------------------

    tm = min(tile_edges, n_edges)
    tn = min(tile_nodes, n_nodes)
    assert n_edges % tm == 0 and n_nodes % tn == 0
    # TODO(synk): ragged n_edges/n_nodes would need padding or BoundedSlice handling.

    kernel = functools.partial(_affinity_kernel, n_heads=n_heads, slope=slope)

    grid = (n_edges // tm, n_nodes // tn)
    return pl.pallas_call(
        kernel,
        out_shape=jax.ShapeDtypeStruct((n_edges, n_nodes), vertex.dtype),
        grid_spec=pltpu.PrefetchScalarGridSpec(
            num_scalar_prefetch=0,
            grid=grid,
            in_specs=[
                pl.BlockSpec((tm, hd), lambda i, j: (i, 0)),          # g_edge tile
                pl.BlockSpec((hd, tn), lambda i, j: (0, j)),          # g_vert^T tile
                pl.BlockSpec((n_heads, hd), lambda i, j: (0, 0)),     # head-mix scale
            ],
            out_specs=pl.BlockSpec((tm, tn), lambda i, j: (i, j)),
        ),
        compiler_params=pltpu.CompilerParams(
            dimension_semantics=("parallel", "parallel")),
    )(g_edge, g_vert_t, scale)


def _reference(vertex, edge, w_vert, w_edge, w_attn, n_heads, n_hidden, slope=0.2):
    g_v = (vertex @ w_vert.T).reshape(vertex.shape[0], n_heads, n_hidden)
    g_e = (edge @ w_edge.T).reshape(edge.shape[0], n_heads, n_hidden)
    s = jnp.einsum("mhd,nhd->mnh", g_e, g_v)              # [n_edges, n_nodes, H]
    a = jnp.einsum("mnh,jh->mnj", s, w_attn)              # attn linear (no bias)
    a = jnp.where(a >= 0, a, slope * a)                   # LeakyReLU
    return a.sum(axis=-1)                                 # sum over heads


if __name__ == "__main__":
    # Module config (is_concat=True): in_features=64, out_features=64, n_heads=4 -> n_hidden=16
    in_features = 64
    out_features = 64
    n_heads = 4
    n_hidden = out_features // n_heads
    n_nodes = 256
    n_edges = 256

    key = jax.random.PRNGKey(0)
    k1, k2, k3, k4, k5 = jax.random.split(key, 5)

    # Deterministic parameter init (nn.Linear-style uniform bounds).
    bound_lin = 1.0 / (in_features ** 0.5)
    bound_attn = 1.0 / (n_heads ** 0.5)
    w_vert = jax.random.uniform(k1, (n_heads * n_hidden, in_features),
                                jnp.float32, -bound_lin, bound_lin)
    w_edge = jax.random.uniform(k2, (n_heads * n_hidden, in_features),
                                jnp.float32, -bound_lin, bound_lin)
    w_attn = jax.random.uniform(k3, (n_heads, n_heads),
                                jnp.float32, -bound_attn, bound_attn)

    vertex = jax.random.normal(k4, (n_nodes, in_features), jnp.float32)
    edge = jax.random.normal(k5, (n_edges, in_features), jnp.float32)

    # NOTE: dropout/softmax are defined in __init__ but never used in forward -> not applied.
    # tm=128 keeps >=2 edge-axis tiles (both v7x TCs busy); tn=256 is lane-dense (2x128).
    out = affinity_layer_cora(vertex, edge, w_vert, w_edge, w_attn,
                              n_heads=n_heads, n_hidden=n_hidden,
                              tile_edges=128, tile_nodes=256)
    out = jax.block_until_ready(out)

    ref = _reference(vertex, edge, w_vert, w_edge, w_attn, n_heads, n_hidden)
    assert out.shape == (n_edges, n_nodes)
    assert jnp.all(jnp.isfinite(out))
    # Loose tolerance: bf16 MXU operands vs f32 XLA reference.
    assert jnp.allclose(out, ref, rtol=2e-2, atol=2e-2), float(jnp.max(jnp.abs(out - ref)))

    print("KERNEL_OK")
</pallas_src>

<mosaic_0001>
module attributes {stable_mosaic.version = 11 : i64} {
  func.func @_affinity_kernel(%arg0: i32, %arg1: i32, %arg2: memref<128x64xbf16, #tpu.memory_space<vmem>>, %arg3: memref<64x256xbf16, #tpu.memory_space<vmem>>, %arg4: memref<4x64xbf16, #tpu.memory_space<vmem>>, %arg5: memref<128x256xf32, #tpu.memory_space<vmem>>) attributes {dimension_semantics = [#tpu.dimension_semantics<parallel>, #tpu.dimension_semantics<parallel>], iteration_bounds = array<i64: 2, 1>, scalar_prefetch = 0 : i64, scratch_operands = 0 : i64, tpu.core_type = #tpu.core_type<tc>, window_params = [{transform_indices = @transform_0, window_bounds = array<i64: 128, 64>}, {transform_indices = @transform_1, window_bounds = array<i64: 64, 256>}, {pipeline_mode = #tpu.pipeline_mode<synchronous>, transform_indices = @transform_2, window_bounds = array<i64: 4, 64>}, {transform_indices = @transform_3, window_bounds = array<i64: 128, 256>}]} {
    %c0 = arith.constant 0 : index
    %c0_0 = arith.constant 0 : index
    %0 = vector.load %arg2[%c0, %c0_0] : memref<128x64xbf16, #tpu.memory_space<vmem>>, vector<128x64xbf16>
    %c0_1 = arith.constant 0 : index
    %c0_2 = arith.constant 0 : index
    %1 = vector.load %arg3[%c0_1, %c0_2] : memref<64x256xbf16, #tpu.memory_space<vmem>>, vector<64x256xbf16>
    %c0_3 = arith.constant 0 : index
    %c0_4 = arith.constant 0 : index
    %2 = vector.load %arg4[%c0_3, %c0_4] : memref<4x64xbf16, #tpu.memory_space<vmem>>, vector<4x64xbf16>
    %cst = arith.constant 0.000000e+00 : f32
    %3 = vector.broadcast %cst : f32 to vector<128x256xf32>
    %4 = vector.extract_strided_slice %2 {offsets = [0, 0], sizes = [1, 64], strides = [1, 1]} : vector<4x64xbf16> to vector<1x64xbf16>
    %5 = vector.broadcast %4 : vector<1x64xbf16> to vector<128x64xbf16>
    %6 = arith.mulf %0, %5 : vector<128x64xbf16>
    %cst_5 = arith.constant dense<0.000000e+00> : vector<128x256xf32>
    %7 = tpu.matmul %6, %1, %cst_5 {dimension_numbers = #tpu.dot_dimension_numbers<[1], [0], [0], [1], [0, 0, 1, 1], [], []>} : vector<128x64xbf16>, vector<64x256xbf16>, vector<128x256xf32> -> vector<128x256xf32>
    %cst_6 = arith.constant 2.000000e-01 : f32
    %8 = vector.broadcast %cst_6 : f32 to vector<128x256xf32>
    %9 = arith.mulf %8, %7 : vector<128x256xf32>
    %10 = arith.maximumf %7, %9 : vector<128x256xf32>
    %11 = arith.addf %3, %10 : vector<128x256xf32>
    %12 = vector.extract_strided_slice %2 {offsets = [1, 0], sizes = [1, 64], strides = [1, 1]} : vector<4x64xbf16> to vector<1x64xbf16>
    %13 = vector.broadcast %12 : vector<1x64xbf16> to vector<128x64xbf16>
    %14 = arith.mulf %0, %13 : vector<128x64xbf16>
    %cst_7 = arith.constant dense<0.000000e+00> : vector<128x256xf32>
    %15 = tpu.matmul %14, %1, %cst_7 {dimension_numbers = #tpu.dot_dimension_numbers<[1], [0], [0], [1], [0, 0, 1, 1], [], []>} : vector<128x64xbf16>, vector<64x256xbf16>, vector<128x256xf32> -> vector<128x256xf32>
    %cst_8 = arith.constant 2.000000e-01 : f32
    %16 = vector.broadcast %cst_8 : f32 to vector<128x256xf32>
    %17 = arith.mulf %16, %15 : vector<128x256xf32>
    %18 = arith.maximumf %15, %17 : vector<128x256xf32>
    %19 = arith.addf %11, %18 : vector<128x256xf32>
    %20 = vector.extract_strided_slice %2 {offsets = [2, 0], sizes = [1, 64], strides = [1, 1]} : vector<4x64xbf16> to vector<1x64xbf16>
    %21 = vector.broadcast %20 : vector<1x64xbf16> to vector<128x64xbf16>
    %22 = arith.mulf %0, %21 : vector<128x64xbf16>
    %cst_9 = arith.constant dense<0.000000e+00> : vector<128x256xf32>
    %23 = tpu.matmul %22, %1, %cst_9 {dimension_numbers = #tpu.dot_dimension_numbers<[1], [0], [0], [1], [0, 0, 1, 1], [], []>} : vector<128x64xbf16>, vector<64x256xbf16>, vector<128x256xf32> -> vector<128x256xf32>
    %cst_10 = arith.constant 2.000000e-01 : f32
    %24 = vector.broadcast %cst_10 : f32 to vector<128x256xf32>
    %25 = arith.mulf %24, %23 : vector<128x256xf32>
    %26 = arith.maximumf %23, %25 : vector<128x256xf32>
    %27 = arith.addf %19, %26 : vector<128x256xf32>
    %28 = vector.extract_strided_slice %2 {offsets = [3, 0], sizes = [1, 64], strides = [1, 1]} : vector<4x64xbf16> to vector<1x64xbf16>
    %29 = vector.broadcast %28 : vector<1x64xbf16> to vector<128x64xbf16>
    %30 = arith.mulf %0, %29 : vector<128x64xbf16>
    %cst_11 = arith.constant dense<0.000000e+00> : vector<128x256xf32>
    %31 = tpu.matmul %30, %1, %cst_11 {dimension_numbers = #tpu.dot_dimension_numbers<[1], [0], [0], [1], [0, 0, 1, 1], [], []>} : vector<128x64xbf16>, vector<64x256xbf16>, vector<128x256xf32> -> vector<128x256xf32>
    %cst_12 = arith.constant 2.000000e-01 : f32
    %32 = vector.broadcast %cst_12 : f32 to vector<128x256xf32>
    %33 = arith.mulf %32, %31 : vector<128x256xf32>
    %34 = arith.maximumf %31, %33 : vector<128x256xf32>
    %35 = arith.addf %27, %34 : vector<128x256xf32>
    %c0_13 = arith.constant 0 : index
    %c0_14 = arith.constant 0 : index
    %36 = vector.load %arg5[%c0_13, %c0_14] : memref<128x256xf32, #tpu.memory_space<vmem>>, vector<128x256xf32>
    tpu.vector_store %arg5[%c0_13, %c0_14], %35 {strides = array<i32>} : memref<128x256xf32, #tpu.memory_space<vmem>>, vector<128x256xf32>,
    return
  }
  func.func @transform_0(%arg0: i32, %arg1: i32) -> (i32, i32) {
    %c0_i32 = arith.constant 0 : i32
    %c0_i32_0 = arith.constant 0 : i32
    return %arg0, %c0_i32 : i32, i32
  }
  func.func @transform_1(%arg0: i32, %arg1: i32) -> (i32, i32) {
    %c0_i32 = arith.constant 0 : i32
    %c0_i32_0 = arith.constant 0 : i32
    return %c0_i32, %arg1 : i32, i32
  }
  func.func @transform_2(%arg0: i32, %arg1: i32) -> (i32, i32) {
    %c0_i32 = arith.constant 0 : i32
    %c0_i32_0 = arith.constant 0 : i32
    %c0_i32_1 = arith.constant 0 : i32
    return %c0_i32, %c0_i32_0 : i32, i32
  }
  func.func @transform_3(%arg0: i32, %arg1: i32) -> (i32, i32) {
    %c0_i32 = arith.constant 0 : i32
    return %arg0, %arg1 : i32, i32
  }
}

</mosaic_0001>

<llo_original>
// kernel: tpu_custom_call.1
$region0: #{tpu_custom_call.1}
  #allocation0 [shape = 'u32[]', space=smem, size = 0x4, offset = 0x4, fixed_abs, tag = 'smem constant byte address 0x4 - core index']
  #allocation1 [shape = 'u32[72,128]{1,0:T(1,128)}', space=vmem, size = 0x9000, scoped, tag = 'internal scratch']
  %s0 = inlined_call_operand.vmem [shape: bf16[256,64], index: 0, kind: input, shape index: {}]
  %s1 = inlined_call_operand.vmem [shape: bf16[64,256], index: 1, kind: input, shape index: {}]
  %s2 = inlined_call_operand.vmem [shape: bf16[4,64], index: 2, kind: input, shape index: {}]
  %s3 = inlined_call_operand.hbm [shape: f32[256,256], index: 3, kind: output, shape index: {}]
  %s4 = sld [smem:[#allocation0]]
  $region45: #{tpu_custom_call.1} parent=0
    _
  %s6 = ssub.s32 1, %s4
  %s7 = scalar_select 0, %s6, %s4
  $region1: #{tpu_custom_call.1} parent=0
    #allocation2 [shape = 'u8[262144]{0}', space=vmem, size = 0x40000, scoped, tag = 'output window, operand 0']
    #allocation3 [shape = 's32[2]{0}', space=sflag, size = 0x8, scoped, tag = 'scoped memory for tpu_custom_call.1']
    %8 = vsyncpa [#allocation3], 0
    %s9 = scalar_lea.sflag [#allocation3], 1
    %10 = vsyncpa %s9, 0
    loop: start=0, step=1, limit=4
    $region2: #{tpu_custom_call.1} parent=1 // loop_pre_header
      _
    $region3: #{tpu_custom_call.1} parent=1 // loop_header
      %s12 = sphi 0, %s16
      %p13 = scmp.ge.s32.totalorder %s12, 4
      %s19 = sphi 0, %s31
      %s20 = sphi 0, %s27
      %s21 = sphi 0, %s19
      %s22 = sphi 0, %s20
      %s23 = sphi 0, %s21
      %s24 = sphi 0, %s22
      %s34 = sphi 0, %s36
      %s37 = sphi 0, %s34
      %s38 = sphi 0, %s37
      %s54 = sphi 0, %s38
      %s60 = sphi 0, %s62
      %s63 = sphi 0, %s60
      %s64 = sphi 0, %s63
      %s80 = sphi 0, %s64
      %s84 = sphi 0, %s84
      %s86 = sphi 0, %s84
      %s87 = sphi 0, %s86
      %s101 = sphi 0, %s87
      %s109 = sphi 0, %s111
      %s112 = sphi 0, %s109
      %s113 = sphi 0, %s112
      %s129 = sphi 0, %s113
    $region4: #{tpu_custom_call.1} parent=1 // loop_header_branch
      %15 = sbr.rel (%p13) target = $region8
    $region5: #{tpu_custom_call.1} parent=1 // loop_body
      %s17 = ssub.s32 %s12, 1
      %s18 = ssub.s32 %s12, 2
      %s25 = sadd.s32 1, %s20
      %p26 = scmp.ge.s32.totalorder %s25, 1
      %s27 = scalar_select %p26, 0, %s25
      %s28 = sadd.s32 1, %s19
      %s29 = scalar_select %p26, %s28, %s19
      %p30 = scmp.ge.s32.totalorder %s29, 2
      %s31 = scalar_select %p30, 0, %s29
      %s32 = ssub.s32 %s19, %s31
      %p33 = scmp.eq.s32.totalorder %s32, 0
      %s35 = sadd.s32 %s34, 1
      %s36 = scalar_select %p33, %s34, %s35
      %p39 = pneg %p33
      %p40 = scmp.eq.s32.totalorder %s12, 1
      %p41 = por %p39, %p40
      %p42 = scmp.ne.s32.totalorder %s34, %s37
      %p43 = scmp.eq.s32.totalorder %s12, 0
      %p44 = por %p42, %p43
      %p45 = scmp.ne.s32.totalorder %s34, %s37
      %p46 = scmp.eq.s32.totalorder %s17, 1
      %p47 = por %p45, %p46
      %p48 = scmp.ne.s32.totalorder %s37, %s38
      %p49 = scmp.eq.s32.totalorder %s17, 0
      %p50 = por %p48, %p49
      %p51 = scmp.ne.s32.totalorder %s37, %s38
      %p52 = scmp.eq.s32.totalorder %s18, 1
      %p53 = por %p51, %p52
      %p55 = scmp.ne.s32.totalorder %s38, %s54
      %p56 = scmp.eq.s32.totalorder %s18, 0
      %p57 = por %p55, %p56
      %s58 = ssub.s32 %s20, %s27
      %p59 = scmp.eq.s32.totalorder %s58, 0
      %s61 = sadd.s32 %s60, 1
      %s62 = scalar_select %p59, %s60, %s61
      %p65 = pneg %p59
      %p66 = scmp.eq.s32.totalorder %s12, 1
      %p67 = por %p65, %p66
      %p68 = scmp.ne.s32.totalorder %s60, %s63
      %p69 = scmp.eq.s32.totalorder %s12, 0
      %p70 = por %p68, %p69
      %p71 = scmp.ne.s32.totalorder %s60, %s63
      %p72 = scmp.eq.s32.totalorder %s17, 1
      %p73 = por %p71, %p72
      %p74 = scmp.ne.s32.totalorder %s63, %s64
      %p75 = scmp.eq.s32.totalorder %s17, 0
      %p76 = por %p74, %p75
      %p77 = scmp.ne.s32.totalorder %s63, %s64
      %p78 = scmp.eq.s32.totalorder %s18, 1
      %p79 = por %p77, %p78
      %p81 = scmp.ne.s32.totalorder %s64, %s80
      %p82 = scmp.eq.s32.totalorder %s18, 0
      %p83 = por %p81, %p82
      %s85 = sadd.s32 %s84, 1
      %p88 = scmp.eq.s32.totalorder %s12, 1
      %p89 = scmp.ne.s32.totalorder %s84, %s86
      %p90 = scmp.eq.s32.totalorder %s12, 0
      %p91 = por %p89, %p90
      %p92 = scmp.ne.s32.totalorder %s84, %s86
      %p93 = scmp.eq.s32.totalorder %s17, 1
      %p94 = por %p92, %p93
      %p95 = scmp.ne.s32.totalorder %s86, %s87
      %p96 = scmp.eq.s32.totalorder %s17, 0
      %p97 = por %p95, %p96
      %p98 = scmp.ne.s32.totalorder %s86, %s87
      %p99 = scmp.eq.s32.totalorder %s18, 1
      %p100 = por %p98, %p99
      %p102 = scmp.ne.s32.totalorder %s87, %s101
      %p103 = scmp.eq.s32.totalorder %s18, 0
      %p104 = por %p102, %p103
      %s105 = ssub.s32 %s19, %s31
      %s106 = ssub.s32 %s20, %s27
      %s107 = sor.u32 %s105, %s106
      %p108 = scmp.eq.s32.totalorder %s107, 0
      %s110 = sadd.s32 %s109, 1
      %s111 = scalar_select %p108, %s109, %s110
      %p114 = pneg %p108
      %p115 = scmp.eq.s32.totalorder %s12, 1
      %p116 = por %p114, %p115
      %p117 = scmp.ne.s32.totalorder %s109, %s112
      %p118 = scmp.eq.s32.totalorder %s12, 0
      %p119 = por %p117, %p118
      %p120 = scmp.ne.s32.totalorder %s109, %s112
      %p121 = scmp.eq.s32.totalorder %s17, 1
      %p122 = por %p120, %p121
      %p123 = scmp.ne.s32.totalorder %s112, %s113
      %p124 = scmp.eq.s32.totalorder %s17, 0
      %p125 = por %p123, %p124
      %p126 = scmp.ne.s32.totalorder %s112, %s113
      %p127 = scmp.eq.s32.totalorder %s18, 1
      %p128 = por %p126, %p127
      %p130 = scmp.ne.s32.totalorder %s113, %s129
      %p131 = scmp.eq.s32.totalorder %s18, 0
      %p132 = por %p130, %p131
      %p133 = scmp.le.s32.totalorder 1, %s12
      %p134 = scmp.lt.s32.totalorder %s12, 3
      %p135 = pnand %p133, %p134
      %p136 = pneg %p135
      // Predicated region
      $region9: #{tpu_custom_call.1} parent=5 // pred_check
        _
      $region10: #{tpu_custom_call.1} parent=5 // pred_check_branch
        %138 = sbr.rel (%p135) target = $region12
      $region11: #{tpu_custom_call.1} parent=5 // pred_region
        %s139 = ssub.s32 %s12, 1
        // Predicated region
        $region13: #{tpu_custom_call.1} parent=11 // pred_check
          %p140 = pneg %p76
        $region14: #{tpu_custom_call.1} parent=11 // pred_check_branch
          %142 = sbr.rel (%p140) target = $region16
        $region15: #{tpu_custom_call.1} parent=11 // pred_region
          %s143 = smul.u32 2, %s22
          %p144 = scmp.lt.s32.totalorder %s143, 1
          %s145 = scalar_select %p144, %s143, 1
          %s146 = smul.addr %s145, 4
          %s147 = scalar_lea.vmem %s1, %s146
          %s148 = smul.u32 2, %s22
        $region16: #{tpu_custom_call.1} parent=11 // pred_fallthru
          _
        // Predicated region
        $region17: #{tpu_custom_call.1} parent=11 // pred_check
          %p149 = pneg %p97
        $region18: #{tpu_custom_call.1} parent=11 // pred_check_branch
          %151 = sbr.rel (%p149) target = $region20
        $region19: #{tpu_custom_call.1} parent=11 // pred_region
          _
        $region20: #{tpu_custom_call.1} parent=11 // pred_fallthru
          _
      $region12: #{tpu_custom_call.1} parent=5 // pred_fallthru
        _
      %p152 = scmp.lt.s32.totalorder %s12, 2
      // Predicated region
      $region21: #{tpu_custom_call.1} parent=5 // pred_check
        %p153 = pneg %p152
      $region22: #{tpu_custom_call.1} parent=5 // pred_check_branch
        %155 = sbr.rel (%p153) target = $region24
      $region23: #{tpu_custom_call.1} parent=5 // pred_region
        // Predicated region
        $region25: #{tpu_custom_call.1} parent=23 // pred_check
          %p156 = pneg %p44
        $region26: #{tpu_custom_call.1} parent=23 // pred_check_branch
          %158 = sbr.rel (%p156) target = $region28
        $region27: #{tpu_custom_call.1} parent=23 // pred_region
          %s159 = smul.u32 16, %s19
          %p160 = scmp.lt.s32.totalorder %s159, 31
          %s161 = scalar_select %p160, %s159, 31
          %s162 = smul.addr %s161, 4
          %s163 = scalar_lea.vmem %s0, %s162
          %s164 = smul.u32 16, %s19
        $region28: #{tpu_custom_call.1} parent=23 // pred_fallthru
          _
      $region24: #{tpu_custom_call.1} parent=5 // pred_fallthru
        _
      %p165 = scmp.le.s32.totalorder 1, %s12
      %p166 = scmp.lt.s32.totalorder %s12, 3
      %p167 = pnand %p165, %p166
      %p168 = pneg %p167
      // Predicated region
      $region29: #{tpu_custom_call.1} parent=5 // pred_check
        _
      $region30: #{tpu_custom_call.1} parent=5 // pred_check_branch
        %170 = sbr.rel (%p167) target = $region32
      $region31: #{tpu_custom_call.1} parent=5 // pred_region
        %s171 = ssub.s32 %s12, 1
        %s172 = smul.u32 16, %s21
        %p173 = scmp.lt.s32.totalorder %s172, 31
        %s174 = scalar_select %p173, %s172, 31
        %s175 = smul.addr %s174, 4
        %s176 = scalar_lea.vmem %s0, %s175
        %p177 = pneg %p50
        %p178 = pneg %p47
        %s179 = smul.u32 2, %s22
        %p180 = scmp.lt.s32.totalorder %s179, 1
        %s181 = scalar_select %p180, %s179, 1
        %s182 = smul.addr %s181, 4
        %s183 = scalar_lea.vmem %s1, %s182
        %p184 = pneg %p76
        %p185 = pneg %p73
        %p186 = pneg %p97
        %p187 = pneg %p94
        %p188 = pneg %p125
        %p189 = pneg %p122
        %s190 = sand.u32 %s112, 1
        %s191 = scalar_lea.sflag [#allocation3], %s190
        %s192 = sand.u32 %s112, 1
        %s193 = smul.addr %s192, 256
        %s194 = scalar_lea.vmem [#allocation2], %s193
        %s195 = smul.u32 16, %s21
        %p196 = scmp.lt.s32.totalorder %s195, 31
        %s197 = scalar_select %p196, %s195, 31
        %s198 = smul.addr %s197, 4
        %s199 = scalar_lea.vmem %s0, %s198
        %s200 = smul.u32 16, %s21
        %s201 = smul.u32 2, %s22
        %p202 = scmp.lt.s32.totalorder %s201, 1
        %s203 = scalar_select %p202, %s201, 1
        %s204 = smul.addr %s203, 4
        %s205 = scalar_lea.vmem %s1, %s204
        %s206 = smul.u32 2, %s22
        %s207 = smul.u32 16, %s21
        %s208 = smul.u32 2, %s22
        %v210 = vld [vmem:[%s199] sm:$0xf]
        %v211 = vld [vmem:[%s199 + $0x4] sm:$0xf]
        %v212 = vld [vmem:[%s199 + $0x8] sm:$0xf]
        %v213 = vld [vmem:[%s199 + $0xc] sm:$0xf]
        %v214 = vld [vmem:[%s199 + $0x10] sm:$0xf]
        %v215 = vld [vmem:[%s199 + $0x14] sm:$0xf]
        %v216 = vld [vmem:[%s199 + $0x18] sm:$0xf]
        %v217 = vld [vmem:[%s199 + $0x1c] sm:$0xf]
        %v218 = vld [vmem:[%s199 + $0x20] sm:$0xf]
        %v219 = vld [vmem:[%s199 + $0x24] sm:$0xf]
        %v220 = vld [vmem:[%s199 + $0x28] sm:$0xf]
        %v221 = vld [vmem:[%s199 + $0x2c] sm:$0xf]
        %v222 = vld [vmem:[%s199 + $0x30] sm:$0xf]
        %v223 = vld [vmem:[%s199 + $0x34] sm:$0xf]
        %v224 = vld [vmem:[%s199 + $0x38] sm:$0xf]
        %v225 = vld [vmem:[%s199 + $0x3c] sm:$0xf]
        %v226 = vld [vmem:[%s205] sm:$0xff]
        %v227 = vld [vmem:[%s205 + $0x8] sm:$0xff]
        %v228 = vld [vmem:[%s205 + $0x10] sm:$0xff]
        %v229 = vld [vmem:[%s205 + $0x18] sm:$0xff]
        %v230 = vld [vmem:[%s205 + $0x20] sm:$0xff]
        %v231 = vld [vmem:[%s205 + $0x28] sm:$0xff]
        %v232 = vld [vmem:[%s205 + $0x30] sm:$0xff]
        %v233 = vld [vmem:[%s205 + $0x38] sm:$0xff]
        %v234 = vld [vmem:[%s2] sm:$0x3]
        %v236 = vpack.i.b16 %v234, %v234
        %v238 = vperm.slane %v236, 0
        %v239 = vunpack.c.l.bf16 %v210
        %v240 = vunpack.c.l.bf16 %v211
        %v241 = vunpack.c.l.bf16 %v212
        %v242 = vunpack.c.l.bf16 %v213
        %v243 = vunpack.c.l.bf16 %v214
        %v244 = vunpack.c.l.bf16 %v215
        %v245 = vunpack.c.l.bf16 %v216
        %v246 = vunpack.c.l.bf16 %v217
        %v247 = vunpack.c.l.bf16 %v218
        %v248 = vunpack.c.l.bf16 %v219
        %v249 = vunpack.c.l.bf16 %v220
        %v250 = vunpack.c.l.bf16 %v221
        %v251 = vunpack.c.l.bf16 %v222
        %v252 = vunpack.c.l.bf16 %v223
        %v253 = vunpack.c.l.bf16 %v224
        %v254 = vunpack.c.l.bf16 %v225
        %v255 = vunpack.c.l.bf16 %v238
        %v256 = vmul.f32 %v239, %v255
        %v257 = vmul.f32 %v240, %v255
        %v258 = vmul.f32 %v241, %v255
        %v259 = vmul.f32 %v242, %v255
        %v260 = vmul.f32 %v243, %v255
        %v261 = vmul.f32 %v244, %v255
        %v262 = vmul.f32 %v245, %v255
        %v263 = vmul.f32 %v246, %v255
        %v264 = vmul.f32 %v247, %v255
        %v265 = vmul.f32 %v248, %v255
        %v266 = vmul.f32 %v249, %v255
        %v267 = vmul.f32 %v250, %v255
        %v268 = vmul.f32 %v251, %v255
        %v269 = vmul.f32 %v252, %v255
        %v270 = vmul.f32 %v253, %v255
        %v271 = vmul.f32 %v254, %v255
        %v272 = vpack.c.bf16 %v257, %v256
        %v273 = vpack.c.bf16 %v259, %v258
        %v274 = vpack.c.bf16 %v261, %v260
        %v275 = vpack.c.bf16 %v263, %v262
        %v276 = vpack.c.bf16 %v265, %v264
        %v277 = vpack.c.bf16 %v267, %v266
        %v278 = vpack.c.bf16 %v269, %v268
        %v279 = vpack.c.bf16 %v271, %v270
        %v288 = vunpack.c.l.b16 %v226
        %v289 = vunpack.c.h.b16 %v226
        %v290 = vunpack.c.l.b16 %v227
        %v291 = vunpack.c.h.b16 %v227
        %v292 = vunpack.c.l.b16 %v228
        %v293 = vunpack.c.h.b16 %v228
        %v294 = vunpack.c.l.b16 %v229
        %v295 = vunpack.c.h.b16 %v229
        %v296 = vunpack.c.l.b16 %v230
        %v297 = vunpack.c.h.b16 %v230
        %v298 = vunpack.c.l.b16 %v231
        %v299 = vunpack.c.h.b16 %v231
        %v300 = vunpack.c.l.b16 %v232
        %v301 = vunpack.c.h.b16 %v232
        %v302 = vunpack.c.l.b16 %v233
        %v303 = vunpack.c.h.b16 %v233
        %v304 = vpack.c.b16 %v290, %v288
        %v305 = vpack.c.b16 %v291, %v289
        %v306 = vpack.c.b16 %v294, %v292
        %v307 = vpack.c.b16 %v295, %v293
        %v308 = vpack.c.b16 %v298, %v296
        %v309 = vpack.c.b16 %v299, %v297
        %v310 = vpack.c.b16 %v302, %v300
        %v311 = vpack.c.b16 %v303, %v301
        %vm320 = vcmask 523264
        %v322 = vsel %vm320, %v272, 0
        %v325 = vsel %vm320, %v273, 0
        %v328 = vsel %vm320, %v274, 0
        %v331 = vsel %vm320, %v275, 0
        %v334 = vsel %vm320, %v276, 0
        %v337 = vsel %vm320, %v277, 0
        %v340 = vsel %vm320, %v278, 0
        %v343 = vsel %vm320, %v279, 0
        %345 = vmatpush.bf16.msra.mxu0 0
        %346 = vmatpush.bf16.msra.mxu0 0
        %347 = vmatpush.bf16.msra.mxu0 0
        %348 = vmatpush.bf16.msra.mxu0 0
        %349 = vmatpush.bf16.msra.mxu0 %v310
        %350 = vmatpush.bf16.msra.mxu0 %v308
        %351 = vmatpush.bf16.msra.mxu0 %v306
        %352 = vmatpush.bf16.msra.mxu0 %v304
        %353 = vmatmul.bf16.gmra.mxu0 %v322
        %v354 = vpop.f32.mrf.mxu0
        %v355 = vadd.f32 0.0, %v354
        %v356 = vpop.f32.mrf.mxu0
        %v357 = vadd.f32 0.0, %v356
        %358 = vmatmul.bf16.gmra.mxu0 %v325
        %v359 = vpop.f32.mrf.mxu0
        %v360 = vadd.f32 0.0, %v359
        %v361 = vpop.f32.mrf.mxu0
        %v362 = vadd.f32 0.0, %v361
        %363 = vmatmul.bf16.gmra.mxu0 %v328
        %v364 = vpop.f32.mrf.mxu0
        %v365 = vadd.f32 0.0, %v364
        %v366 = vpop.f32.mrf.mxu0
        %v367 = vadd.f32 0.0, %v366
        %368 = vmatmul.bf16.gmra.mxu0 %v331
        %v369 = vpop.f32.mrf.mxu0
        %v370 = vadd.f32 0.0, %v369
        %v371 = vpop.f32.mrf.mxu0
        %v372 = vadd.f32 0.0, %v371
        %373 = vmatmul.bf16.gmra.mxu0 %v334
        %v374 = vpop.f32.mrf.mxu0
        %v375 = vadd.f32 0.0, %v374
        %v376 = vpop.f32.mrf.mxu0
        %v377 = vadd.f32 0.0, %v376
        %378 = vmatmul.bf16.gmra.mxu0 %v337
        %v379 = vpop.f32.mrf.mxu0
        %v380 = vadd.f32 0.0, %v379
        %v381 = vpop.f32.mrf.mxu0
        %v382 = vadd.f32 0.0, %v381
        %383 = vmatmul.bf16.gmra.mxu0 %v340
        %v384 = vpop.f32.mrf.mxu0
        %v385 = vadd.f32 0.0, %v384
        %v386 = vpop.f32.mrf.mxu0
        %v387 = vadd.f32 0.0, %v386
        %388 = vmatmul.bf16.gmra.mxu0 %v343
        %v389 = vpop.f32.mrf.mxu0
        %v390 = vadd.f32 0.0, %v389
        %v391 = vpop.f32.mrf.mxu0
        %v392 = vadd.f32 0.0, %v391
        %393 = vdwg.mxu0
        %394 = vmatpush.bf16.msra.mxu0 0
        %395 = vmatpush.bf16.msra.mxu0 0
        %396 = vmatpush.bf16.msra.mxu0 0
        %397 = vmatpush.bf16.msra.mxu0 0
        %398 = vmatpush.bf16.msra.mxu0 %v311
        %399 = vmatpush.bf16.msra.mxu0 %v309
        %400 = vmatpush.bf16.msra.mxu0 %v307
        %401 = vmatpush.bf16.msra.mxu0 %v305
        %402 = vmatmul.bf16.gmra.mxu0 %v322
        %v403 = vpop.f32.mrf.mxu0
        %v404 = vadd.f32 0.0, %v403
        %v405 = vpop.f32.mrf.mxu0
        %v406 = vadd.f32 0.0, %v405
        %407 = vmatmul.bf16.gmra.mxu0 %v325
        %v408 = vpop.f32.mrf.mxu0
        %v409 = vadd.f32 0.0, %v408
        %v410 = vpop.f32.mrf.mxu0
        %v411 = vadd.f32 0.0, %v410
        %412 = vmatmul.bf16.gmra.mxu0 %v328
        %v413 = vpop.f32.mrf.mxu0
        %v414 = vadd.f32 0.0, %v413
        %v415 = vpop.f32.mrf.mxu0
        %v416 = vadd.f32 0.0, %v415
        %417 = vmatmul.bf16.gmra.mxu0 %v331
        %v418 = vpop.f32.mrf.mxu0
        %v419 = vadd.f32 0.0, %v418
        %v420 = vpop.f32.mrf.mxu0
        %v421 = vadd.f32 0.0, %v420
        %422 = vmatmul.bf16.gmra.mxu0 %v334
        %v423 = vpop.f32.mrf.mxu0
        %v424 = vadd.f32 0.0, %v423
        %v425 = vpop.f32.mrf.mxu0
        %v426 = vadd.f32 0.0, %v425
        %427 = vmatmul.bf16.gmra.mxu0 %v337
        %v428 = vpop.f32.mrf.mxu0
        %v429 = vadd.f32 0.0, %v428
        %v430 = vpop.f32.mrf.mxu0
        %v431 = vadd.f32 0.0, %v430
        %432 = vmatmul.bf16.gmra.mxu0 %v340
        %v433 = vpop.f32.mrf.mxu0
        %v434 = vadd.f32 0.0, %v433
        %v435 = vpop.f32.mrf.mxu0
        %v436 = vadd.f32 0.0, %v435
        %437 = vmatmul.bf16.gmra.mxu0 %v343
        %v438 = vpop.f32.mrf.mxu0
        %v439 = vadd.f32 0.0, %v438
        %v440 = vpop.f32.mrf.mxu0
        %v441 = vadd.f32 0.0, %v440
        %442 = vdwg.mxu0
        %v443 = vmul.f32 %v355, 0.2
        %v444 = vmul.f32 %v404, 0.2
        %v445 = vmul.f32 %v357, 0.2
        %v446 = vmul.f32 %v406, 0.2
        %v447 = vmul.f32 %v360, 0.2
        %v448 = vmul.f32 %v409, 0.2
        %v449 = vmul.f32 %v362, 0.2
        %v450 = vmul.f32 %v411, 0.2
        %v451 = vmul.f32 %v365, 0.2
        %v452 = vmul.f32 %v414, 0.2
        %v453 = vmul.f32 %v367, 0.2
        %v454 = vmul.f32 %v416, 0.2
        %v455 = vmul.f32 %v370, 0.2
        %v456 = vmul.f32 %v419, 0.2
        %v457 = vmul.f32 %v372, 0.2
        %v458 = vmul.f32 %v421, 0.2
        %v459 = vmul.f32 %v375, 0.2
        %v460 = vmul.f32 %v424, 0.2
        %v461 = vmul.f32 %v377, 0.2
        %v462 = vmul.f32 %v426, 0.2
        %v463 = vmul.f32 %v380, 0.2
        %v464 = vmul.f32 %v429, 0.2
        %v465 = vmul.f32 %v382, 0.2
        %v466 = vmul.f32 %v431, 0.2
        %v467 = vmul.f32 %v385, 0.2
        %v468 = vmul.f32 %v434, 0.2
        %v469 = vmul.f32 %v387, 0.2
        %v470 = vmul.f32 %v436, 0.2
        %v471 = vmul.f32 %v390, 0.2
        %v472 = vmul.f32 %v439, 0.2
        %v473 = vmul.f32 %v392, 0.2
        %v474 = vmul.f32 %v441, 0.2
        %v475 = vmax.f32 %v355, %v443
        %v476 = vmax.f32 %v404, %v444
        %v477 = vmax.f32 %v357, %v445
        %v478 = vmax.f32 %v406, %v446
        %v479 = vmax.f32 %v360, %v447
        %v480 = vmax.f32 %v409, %v448
        %v481 = vmax.f32 %v362, %v449
        %v482 = vmax.f32 %v411, %v450
        %v483 = vmax.f32 %v365, %v451
        %v484 = vmax.f32 %v414, %v452
        %v485 = vmax.f32 %v367, %v453
        %v486 = vmax.f32 %v416, %v454
        %v487 = vmax.f32 %v370, %v455
        %v488 = vmax.f32 %v419, %v456
        %v489 = vmax.f32 %v372, %v457
        %v490 = vmax.f32 %v421, %v458
        %v491 = vmax.f32 %v375, %v459
        %v492 = vmax.f32 %v424, %v460
        %v493 = vmax.f32 %v377, %v461
        %v494 = vmax.f32 %v426, %v462
        %v495 = vmax.f32 %v380, %v463
        %v496 = vmax.f32 %v429, %v464
        %v497 = vmax.f32 %v382, %v465
        %v498 = vmax.f32 %v431, %v466
        %v499 = vmax.f32 %v385, %v467
        %v500 = vmax.f32 %v434, %v468
        %v501 = vmax.f32 %v387, %v469
        %v502 = vmax.f32 %v436, %v470
        %v503 = vmax.f32 %v390, %v471
        %v504 = vmax.f32 %v439, %v472
        %v505 = vmax.f32 %v392, %v473
        %v506 = vmax.f32 %v441, %v474
        %v507 = vadd.f32 %v475, 0.0
        %v508 = vadd.f32 %v476, 0.0
        %v509 = vadd.f32 %v477, 0.0
        %v510 = vadd.f32 %v478, 0.0
        %v511 = vadd.f32 %v479, 0.0
        %v512 = vadd.f32 %v480, 0.0
        %v513 = vadd.f32 %v481, 0.0
        %v514 = vadd.f32 %v482, 0.0
        %v515 = vadd.f32 %v483, 0.0
        %v516 = vadd.f32 %v484, 0.0
        %v517 = vadd.f32 %v485, 0.0
        %v518 = vadd.f32 %v486, 0.0
        %v519 = vadd.f32 %v487, 0.0
        %v520 = vadd.f32 %v488, 0.0
        %v521 = vadd.f32 %v489, 0.0
        %v522 = vadd.f32 %v490, 0.0
        %v523 = vadd.f32 %v491, 0.0
        %v524 = vadd.f32 %v492, 0.0
        %v525 = vadd.f32 %v493, 0.0
        %v526 = vadd.f32 %v494, 0.0
        %v527 = vadd.f32 %v495, 0.0
        %v528 = vadd.f32 %v496, 0.0
        %v529 = vadd.f32 %v497, 0.0
        %v530 = vadd.f32 %v498, 0.0
        %v531 = vadd.f32 %v499, 0.0
        %v532 = vadd.f32 %v500, 0.0
        %v533 = vadd.f32 %v501, 0.0
        %v534 = vadd.f32 %v502, 0.0
        %v535 = vadd.f32 %v503, 0.0
        %v536 = vadd.f32 %v504, 0.0
        %v537 = vadd.f32 %v505, 0.0
        %v538 = vadd.f32 %v506, 0.0
        %v539 = vshrl.u32 %v234, 16
        %v540 = vpack.i.b16 %v539, %v539
        %v542 = vperm.slane %v540, 0
        %v543 = vunpack.c.l.bf16 %v542
        %v544 = vmul.f32 %v239, %v543
        %v545 = vmul.f32 %v240, %v543
        %v546 = vmul.f32 %v241, %v543
        %v547 = vmul.f32 %v242, %v543
        %v548 = vmul.f32 %v243, %v543
        %v549 = vmul.f32 %v244, %v543
        %v550 = vmul.f32 %v245, %v543
        %v551 = vmul.f32 %v246, %v543
        %v552 = vmul.f32 %v247, %v543
        %v553 = vmul.f32 %v248, %v543
        %v554 = vmul.f32 %v249, %v543
        %v555 = vmul.f32 %v250, %v543
        %v556 = vmul.f32 %v251, %v543
        %v557 = vmul.f32 %v252, %v543
        %v558 = vmul.f32 %v253, %v543
        %v559 = vmul.f32 %v254, %v543
        %v560 = vpack.c.bf16 %v545, %v544
        %v561 = vpack.c.bf16 %v547, %v546
        %v562 = vpack.c.bf16 %v549, %v548
        %v563 = vpack.c.bf16 %v551, %v550
        %v564 = vpack.c.bf16 %v553, %v552
        %v565 = vpack.c.bf16 %v555, %v554
        %v566 = vpack.c.bf16 %v557, %v556
        %v567 = vpack.c.bf16 %v559, %v558
        %v569 = vsel %vm320, %v560, 0
        %v572 = vsel %vm320, %v561, 0
        %v575 = vsel %vm320, %v562, 0
        %v578 = vsel %vm320, %v563, 0
        %v581 = vsel %vm320, %v564, 0
        %v584 = vsel %vm320, %v565, 0
        %v587 = vsel %vm320, %v566, 0
        %v590 = vsel %vm320, %v567, 0
        %592 = vmatpush.bf16.msra.mxu0 0
        %593 = vmatpush.bf16.msra.mxu0 0
        %594 = vmatpush.bf16.msra.mxu0 0
        %595 = vmatpush.bf16.msra.mxu0 0
        %596 = vmatpush.bf16.msra.mxu0 %v310
        %597 = vmatpush.bf16.msra.mxu0 %v308
        %598 = vmatpush.bf16.msra.mxu0 %v306
        %599 = vmatpush.bf16.msra.mxu0 %v304
        %600 = vmatmul.bf16.gmra.mxu0 %v569
        %v601 = vpop.f32.mrf.mxu0
        %v602 = vadd.f32 0.0, %v601
        %v603 = vpop.f32.mrf.mxu0
        %v604 = vadd.f32 0.0, %v603
        %605 = vmatmul.bf16.gmra.mxu0 %v572
        %v606 = vpop.f32.mrf.mxu0
        %v607 = vadd.f32 0.0, %v606
        %v608 = vpop.f32.mrf.mxu0
        %v609 = vadd.f32 0.0, %v608
        %610 = vmatmul.bf16.gmra.mxu0 %v575
        %v611 = vpop.f32.mrf.mxu0
        %v612 = vadd.f32 0.0, %v611
        %v613 = vpop.f32.mrf.mxu0
        %v614 = vadd.f32 0.0, %v613
        %615 = vmatmul.bf16.gmra.mxu0 %v578
        %v616 = vpop.f32.mrf.mxu0
        %v617 = vadd.f32 0.0, %v616
        %v618 = vpop.f32.mrf.mxu0
        %v619 = vadd.f32 0.0, %v618
        %620 = vmatmul.bf16.gmra.mxu0 %v581
        %v621 = vpop.f32.mrf.mxu0
        %v622 = vadd.f32 0.0, %v621
        %v623 = vpop.f32.mrf.mxu0
        %v624 = vadd.f32 0.0, %v623
        %625 = vmatmul.bf16.gmra.mxu0 %v584
        %v626 = vpop.f32.mrf.mxu0
        %v627 = vadd.f32 0.0, %v626
        %v628 = vpop.f32.mrf.mxu0
        %v629 = vadd.f32 0.0, %v628
        %630 = vmatmul.bf16.gmra.mxu0 %v587
        %v631 = vpop.f32.mrf.mxu0
        %v632 = vadd.f32 0.0, %v631
        %v633 = vpop.f32.mrf.mxu0
        %v634 = vadd.f32 0.0, %v633
        %635 = vmatmul.bf16.gmra.mxu0 %v590
        %v636 = vpop.f32.mrf.mxu0
        %v637 = vadd.f32 0.0, %v636
        %v638 = vpop.f32.mrf.mxu0
        %v639 = vadd.f32 0.0, %v638
        %640 = vdwg.mxu0
        %641 = vmatpush.bf16.msra.mxu0 0
        %642 = vmatpush.bf16.msra.mxu0 0
        %643 = vmatpush.bf16.msra.mxu0 0
        %644 = vmatpush.bf16.msra.mxu0 0
        %645 = vmatpush.bf16.msra.mxu0 %v311
        %646 = vmatpush.bf16.msra.mxu0 %v309
        %647 = vmatpush.bf16.msra.mxu0 %v307
        %648 = vmatpush.bf16.msra.mxu0 %v305
        %649 = vmatmul.bf16.gmra.mxu0 %v569
        %v650 = vpop.f32.mrf.mxu0
        %v651 = vadd.f32 0.0, %v650
        %v652 = vpop.f32.mrf.mxu0
        %v653 = vadd.f32 0.0, %v652
        %654 = vmatmul.bf16.gmra.mxu0 %v572
        %v655 = vpop.f32.mrf.mxu0
        %v656 = vadd.f32 0.0, %v655
        %v657 = vpop.f32.mrf.mxu0
        %v658 = vadd.f32 0.0, %v657
        %659 = vmatmul.bf16.gmra.mxu0 %v575
        %v660 = vpop.f32.mrf.mxu0
        %v661 = vadd.f32 0.0, %v660
        %v662 = vpop.f32.mrf.mxu0
        %v663 = vadd.f32 0.0, %v662
        %664 = vmatmul.bf16.gmra.mxu0 %v578
        %v665 = vpop.f32.mrf.mxu0
        %v666 = vadd.f32 0.0, %v665
        %v667 = vpop.f32.mrf.mxu0
        %v668 = vadd.f32 0.0, %v667
        %669 = vmatmul.bf16.gmra.mxu0 %v581
        %v670 = vpop.f32.mrf.mxu0
        %v671 = vadd.f32 0.0, %v670
        %v672 = vpop.f32.mrf.mxu0
        %v673 = vadd.f32 0.0, %v672
        %674 = vmatmul.bf16.gmra.mxu0 %v584
        %v675 = vpop.f32.mrf.mxu0
        %v676 = vadd.f32 0.0, %v675
        %v677 = vpop.f32.mrf.mxu0
        %v678 = vadd.f32 0.0, %v677
        %679 = vmatmul.bf16.gmra.mxu0 %v587
        %v680 = vpop.f32.mrf.mxu0
        %v681 = vadd.f32 0.0, %v680
        %v682 = vpop.f32.mrf.mxu0
        %v683 = vadd.f32 0.0, %v682
        %684 = vmatmul.bf16.gmra.mxu0 %v590
        %v685 = vpop.f32.mrf.mxu0
        %v686 = vadd.f32 0.0, %v685
        %v687 = vpop.f32.mrf.mxu0
        %v688 = vadd.f32 0.0, %v687
        %689 = vdwg.mxu0
        %v690 = vmul.f32 %v602, 0.2
        %v691 = vmul.f32 %v651, 0.2
        %v692 = vmul.f32 %v604, 0.2
        %v693 = vmul.f32 %v653, 0.2
        %v694 = vmul.f32 %v607, 0.2
        %v695 = vmul.f32 %v656, 0.2
        %v696 = vmul.f32 %v609, 0.2
        %v697 = vmul.f32 %v658, 0.2
        %v698 = vmul.f32 %v612, 0.2
        %v699 = vmul.f32 %v661, 0.2
        %v700 = vmul.f32 %v614, 0.2
        %v701 = vmul.f32 %v663, 0.2
        %v702 = vmul.f32 %v617, 0.2
        %v703 = vmul.f32 %v666, 0.2
        %v704 = vmul.f32 %v619, 0.2
        %v705 = vmul.f32 %v668, 0.2
        %v706 = vmul.f32 %v622, 0.2
        %v707 = vmul.f32 %v671, 0.2
        %v708 = vmul.f32 %v624, 0.2
        %v709 = vmul.f32 %v673, 0.2
        %v710 = vmul.f32 %v627, 0.2
        %v711 = vmul.f32 %v676, 0.2
        %v712 = vmul.f32 %v629, 0.2
        %v713 = vmul.f32 %v678, 0.2
        %v714 = vmul.f32 %v632, 0.2
        %v715 = vmul.f32 %v681, 0.2
        %v716 = vmul.f32 %v634, 0.2
        %v717 = vmul.f32 %v683, 0.2
        %v718 = vmul.f32 %v637, 0.2
        %v719 = vmul.f32 %v686, 0.2
        %v720 = vmul.f32 %v639, 0.2
        %v721 = vmul.f32 %v688, 0.2
        %v722 = vmax.f32 %v602, %v690
        %v723 = vmax.f32 %v651, %v691
        %v724 = vmax.f32 %v604, %v692
        %v725 = vmax.f32 %v653, %v693
        %v726 = vmax.f32 %v607, %v694
        %v727 = vmax.f32 %v656, %v695
        %v728 = vmax.f32 %v609, %v696
        %v729 = vmax.f32 %v658, %v697
        %v730 = vmax.f32 %v612, %v698
        %v731 = vmax.f32 %v661, %v699
        %v732 = vmax.f32 %v614, %v700
        %v733 = vmax.f32 %v663, %v701
        %v734 = vmax.f32 %v617, %v702
        %v735 = vmax.f32 %v666, %v703
        %v736 = vmax.f32 %v619, %v704
        %v737 = vmax.f32 %v668, %v705
        %v738 = vmax.f32 %v622, %v706
        %v739 = vmax.f32 %v671, %v707
        %v740 = vmax.f32 %v624, %v708
        %v741 = vmax.f32 %v673, %v709
        %v742 = vmax.f32 %v627, %v710
        %v743 = vmax.f32 %v676, %v711
        %v744 = vmax.f32 %v629, %v712
        %v745 = vmax.f32 %v678, %v713
        %v746 = vmax.f32 %v632, %v714
        %v747 = vmax.f32 %v681, %v715
        %v748 = vmax.f32 %v634, %v716
        %v749 = vmax.f32 %v683, %v717
        %v750 = vmax.f32 %v637, %v718
        %v751 = vmax.f32 %v686, %v719
        %v752 = vmax.f32 %v639, %v720
        %v753 = vmax.f32 %v688, %v721
        %v754 = vadd.f32 %v507, %v722
        %v755 = vadd.f32 %v508, %v723
        %v756 = vadd.f32 %v509, %v724
        %v757 = vadd.f32 %v510, %v725
        %v758 = vadd.f32 %v511, %v726
        %v759 = vadd.f32 %v512, %v727
        %v760 = vadd.f32 %v513, %v728
        %v761 = vadd.f32 %v514, %v729
        %v762 = vadd.f32 %v515, %v730
        %v763 = vadd.f32 %v516, %v731
        %v764 = vadd.f32 %v517, %v732
        %v765 = vadd.f32 %v518, %v733
        %v766 = vadd.f32 %v519, %v734
        %v767 = vadd.f32 %v520, %v735
        %v768 = vadd.f32 %v521, %v736
        %v769 = vadd.f32 %v522, %v737
        %v770 = vadd.f32 %v523, %v738
        %v771 = vadd.f32 %v524, %v739
        %v772 = vadd.f32 %v525, %v740
        %v773 = vadd.f32 %v526, %v741
        %v774 = vadd.f32 %v527, %v742
        %v775 = vadd.f32 %v528, %v743
        %v776 = vadd.f32 %v529, %v744
        %v777 = vadd.f32 %v530, %v745
        %v778 = vadd.f32 %v531, %v746
        %v779 = vadd.f32 %v532, %v747
        %v780 = vadd.f32 %v533, %v748
        %v781 = vadd.f32 %v534, %v749
        %v782 = vadd.f32 %v535, %v750
        %v783 = vadd.f32 %v536, %v751
        %v784 = vadd.f32 %v537, %v752
        %v785 = vadd.f32 %v538, %v753
        %v786 = vperm.slane %v236, 1
        %v787 = vunpack.c.l.bf16 %v786
        %v788 = vmul.f32 %v239, %v787
        %v789 = vmul.f32 %v240, %v787
        %v790 = vmul.f32 %v241, %v787
        %v791 = vmul.f32 %v242, %v787
        %v792 = vmul.f32 %v243, %v787
        %v793 = vmul.f32 %v244, %v787
        %v794 = vmul.f32 %v245, %v787
        %v795 = vmul.f32 %v246, %v787
        %v796 = vmul.f32 %v247, %v787
        %v797 = vmul.f32 %v248, %v787
        %v798 = vmul.f32 %v249, %v787
        %v799 = vmul.f32 %v250, %v787
        %v800 = vmul.f32 %v251, %v787
        %v801 = vmul.f32 %v252, %v787
        %v802 = vmul.f32 %v253, %v787
        %v803 = vmul.f32 %v254, %v787
        %v804 = vpack.c.bf16 %v789, %v788
        %v805 = vpack.c.bf16 %v791, %v790
        %v806 = vpack.c.bf16 %v793, %v792
        %v807 = vpack.c.bf16 %v795, %v794
        %v808 = vpack.c.bf16 %v797, %v796
        %v809 = vpack.c.bf16 %v799, %v798
        %v810 = vpack.c.bf16 %v801, %v800
        %v811 = vpack.c.bf16 %v803, %v802
        %v813 = vsel %vm320, %v804, 0
        %v816 = vsel %vm320, %v805, 0
        %v819 = vsel %vm320, %v806, 0
        %v822 = vsel %vm320, %v807, 0
        %v825 = vsel %vm320, %v808, 0
        %v828 = vsel %vm320, %v809, 0
        %v831 = vsel %vm320, %v810, 0
        %v834 = vsel %vm320, %v811, 0
        %836 = vmatpush.bf16.msra.mxu0 0
        %837 = vmatpush.bf16.msra.mxu0 0
        %838 = vmatpush.bf16.msra.mxu0 0
        %839 = vmatpush.bf16.msra.mxu0 0
        %840 = vmatpush.bf16.msra.mxu0 %v310
        %841 = vmatpush.bf16.msra.mxu0 %v308
        %842 = vmatpush.bf16.msra.mxu0 %v306
        %843 = vmatpush.bf16.msra.mxu0 %v304
        %844 = vmatmul.bf16.gmra.mxu0 %v813
        %v845 = vpop.f32.mrf.mxu0
        %v846 = vadd.f32 0.0, %v845
        %v847 = vpop.f32.mrf.mxu0
        %v848 = vadd.f32 0.0, %v847
        %849 = vmatmul.bf16.gmra.mxu0 %v816
        %v850 = vpop.f32.mrf.mxu0
        %v851 = vadd.f32 0.0, %v850
        %v852 = vpop.f32.mrf.mxu0
        %v853 = vadd.f32 0.0, %v852
        %854 = vmatmul.bf16.gmra.mxu0 %v819
        %v855 = vpop.f32.mrf.mxu0
        %v856 = vadd.f32 0.0, %v855
        %v857 = vpop.f32.mrf.mxu0
        %v858 = vadd.f32 0.0, %v857
        %859 = vmatmul.bf16.gmra.mxu0 %v822
        %v860 = vpop.f32.mrf.mxu0
        %v861 = vadd.f32 0.0, %v860
        %v862 = vpop.f32.mrf.mxu0
        %v863 = vadd.f32 0.0, %v862
        %864 = vmatmul.bf16.gmra.mxu0 %v825
        %v865 = vpop.f32.mrf.mxu0
        %v866 = vadd.f32 0.0, %v865
        %v867 = vpop.f32.mrf.mxu0
        %v868 = vadd.f32 0.0, %v867
        %869 = vmatmul.bf16.gmra.mxu0 %v828
        %v870 = vpop.f32.mrf.mxu0
        %v871 = vadd.f32 0.0, %v870
        %v872 = vpop.f32.mrf.mxu0
        %v873 = vadd.f32 0.0, %v872
        %874 = vmatmul.bf16.gmra.mxu0 %v831
        %v875 = vpop.f32.mrf.mxu0
        %v876 = vadd.f32 0.0, %v875
        %v877 = vpop.f32.mrf.mxu0
        %v878 = vadd.f32 0.0, %v877
        %879 = vmatmul.bf16.gmra.mxu0 %v834
        %v880 = vpop.f32.mrf.mxu0
        %v881 = vadd.f32 0.0, %v880
        %v882 = vpop.f32.mrf.mxu0
        %v883 = vadd.f32 0.0, %v882
        %884 = vdwg.mxu0
        %885 = vmatpush.bf16.msra.mxu0 0
        %886 = vmatpush.bf16.msra.mxu0 0
        %887 = vmatpush.bf16.msra.mxu0 0
        %888 = vmatpush.bf16.msra.mxu0 0
        %889 = vmatpush.bf16.msra.mxu0 %v311
        %890 = vmatpush.bf16.msra.mxu0 %v309
        %891 = vmatpush.bf16.msra.mxu0 %v307
        %892 = vmatpush.bf16.msra.mxu0 %v305
        %893 = vmatmul.bf16.gmra.mxu0 %v813
        %v894 = vpop.f32.mrf.mxu0
        %v895 = vadd.f32 0.0, %v894
        %v896 = vpop.f32.mrf.mxu0
        %v897 = vadd.f32 0.0, %v896
        %898 = vmatmul.bf16.gmra.mxu0 %v816
        %v899 = vpop.f32.mrf.mxu0
        %v900 = vadd.f32 0.0, %v899
        %v901 = vpop.f32.mrf.mxu0
        %v902 = vadd.f32 0.0, %v901
        %903 = vmatmul.bf16.gmra.mxu0 %v819
        %v904 = vpop.f32.mrf.mxu0
        %v905 = vadd.f32 0.0, %v904
        %v906 = vpop.f32.mrf.mxu0
        %v907 = vadd.f32 0.0, %v906
        %908 = vmatmul.bf16.gmra.mxu0 %v822
        %v909 = vpop.f32.mrf.mxu0
        %v910 = vadd.f32 0.0, %v909
        %v911 = vpop.f32.mrf.mxu0
        %v912 = vadd.f32 0.0, %v911
        %913 = vmatmul.bf16.gmra.mxu0 %v825
        %v914 = vpop.f32.mrf.mxu0
        %v915 = vadd.f32 0.0, %v914
        %v916 = vpop.f32.mrf.mxu0
        %v917 = vadd.f32 0.0, %v916
        %918 = vmatmul.bf16.gmra.mxu0 %v828
        %v919 = vpop.f32.mrf.mxu0
        %v920 = vadd.f32 0.0, %v919
        %v921 = vpop.f32.mrf.mxu0
        %v922 = vadd.f32 0.0, %v921
        %923 = vmatmul.bf16.gmra.mxu0 %v831
        %v924 = vpop.f32.mrf.mxu0
        %v925 = vadd.f32 0.0, %v924
        %v926 = vpop.f32.mrf.mxu0
        %v927 = vadd.f32 0.0, %v926
        %928 = vmatmul.bf16.gmra.mxu0 %v834
        %v929 = vpop.f32.mrf.mxu0
        %v930 = vadd.f32 0.0, %v929
        %v931 = vpop.f32.mrf.mxu0
        %v932 = vadd.f32 0.0, %v931
        %933 = vdwg.mxu0
        %v934 = vmul.f32 %v846, 0.2
        %v935 = vmul.f32 %v895, 0.2
        %v936 = vmul.f32 %v848, 0.2
        %v937 = vmul.f32 %v897, 0.2
        %v938 = vmul.f32 %v851, 0.2
        %v939 = vmul.f32 %v900, 0.2
        %v940 = vmul.f32 %v853, 0.2
        %v941 = vmul.f32 %v902, 0.2
        %v942 = vmul.f32 %v856, 0.2
        %v943 = vmul.f32 %v905, 0.2
        %v944 = vmul.f32 %v858, 0.2
        %v945 = vmul.f32 %v907, 0.2
        %v946 = vmul.f32 %v861, 0.2
        %v947 = vmul.f32 %v910, 0.2
        %v948 = vmul.f32 %v863, 0.2
        %v949 = vmul.f32 %v912, 0.2
        %v950 = vmul.f32 %v866, 0.2
        %v951 = vmul.f32 %v915, 0.2
        %v952 = vmul.f32 %v868, 0.2
        %v953 = vmul.f32 %v917, 0.2
        %v954 = vmul.f32 %v871, 0.2
        %v955 = vmul.f32 %v920, 0.2
        %v956 = vmul.f32 %v873, 0.2
        %v957 = vmul.f32 %v922, 0.2
        %v958 = vmul.f32 %v876, 0.2
        %v959 = vmul.f32 %v925, 0.2
        %v960 = vmul.f32 %v878, 0.2
        %v961 = vmul.f32 %v927, 0.2
        %v962 = vmul.f32 %v881, 0.2
        %v963 = vmul.f32 %v930, 0.2
        %v964 = vmul.f32 %v883, 0.2
        %v965 = vmul.f32 %v932, 0.2
        %v966 = vmax.f32 %v846, %v934
        %v967 = vmax.f32 %v895, %v935
        %v968 = vmax.f32 %v848, %v936
        %v969 = vmax.f32 %v897, %v937
        %v970 = vmax.f32 %v851, %v938
        %v971 = vmax.f32 %v900, %v939
        %v972 = vmax.f32 %v853, %v940
        %v973 = vmax.f32 %v902, %v941
        %v974 = vmax.f32 %v856, %v942
        %v975 = vmax.f32 %v905, %v943
        %v976 = vmax.f32 %v858, %v944
        %v977 = vmax.f32 %v907, %v945
        %v978 = vmax.f32 %v861, %v946
        %v979 = vmax.f32 %v910, %v947
        %v980 = vmax.f32 %v863, %v948
        %v981 = vmax.f32 %v912, %v949
        %v982 = vmax.f32 %v866, %v950
        %v983 = vmax.f32 %v915, %v951
        %v984 = vmax.f32 %v868, %v952
        %v985 = vmax.f32 %v917, %v953
        %v986 = vmax.f32 %v871, %v954
        %v987 = vmax.f32 %v920, %v955
        %v988 = vmax.f32 %v873, %v956
        %v989 = vmax.f32 %v922, %v957
        %v990 = vmax.f32 %v876, %v958
        %v991 = vmax.f32 %v925, %v959
        %v992 = vmax.f32 %v878, %v960
        %v993 = vmax.f32 %v927, %v961
        %v994 = vmax.f32 %v881, %v962
        %v995 = vmax.f32 %v930, %v963
        %v996 = vmax.f32 %v883, %v964
        %v997 = vmax.f32 %v932, %v965
        %v998 = vadd.f32 %v754, %v966
        %v999 = vadd.f32 %v755, %v967
        %v1000 = vadd.f32 %v756, %v968
        %v1001 = vadd.f32 %v757, %v969
        %v1002 = vadd.f32 %v758, %v970
        %v1003 = vadd.f32 %v759, %v971
        %v1004 = vadd.f32 %v760, %v972
        %v1005 = vadd.f32 %v761, %v973
        %v1006 = vadd.f32 %v762, %v974
        %v1007 = vadd.f32 %v763, %v975
        %v1008 = vadd.f32 %v764, %v976
        %v1009 = vadd.f32 %v765, %v977
        %v1010 = vadd.f32 %v766, %v978
        %v1011 = vadd.f32 %v767, %v979
        %v1012 = vadd.f32 %v768, %v980
        %v1013 = vadd.f32 %v769, %v981
        %v1014 = vadd.f32 %v770, %v982
        %v1015 = vadd.f32 %v771, %v983
        %v1016 = vadd.f32 %v772, %v984
        %v1017 = vadd.f32 %v773, %v985
        %v1018 = vadd.f32 %v774, %v986
        %v1019 = vadd.f32 %v775, %v987
        %v1020 = vadd.f32 %v776, %v988
        %v1021 = vadd.f32 %v777, %v989
        %v1022 = vadd.f32 %v778, %v990
        %v1023 = vadd.f32 %v779, %v991
        %v1024 = vadd.f32 %v780, %v992
        %v1025 = vadd.f32 %v781, %v993
        %v1026 = vadd.f32 %v782, %v994
        %v1027 = vadd.f32 %v783, %v995
        %v1028 = vadd.f32 %v784, %v996
        %v1029 = vadd.f32 %v785, %v997
        %v1030 = vperm.slane %v540, 1
        %v1031 = vunpack.c.l.bf16 %v1030
        %v1032 = vmul.f32 %v239, %v1031
        %v1033 = vmul.f32 %v240, %v1031
        %v1034 = vmul.f32 %v241, %v1031
        %v1035 = vmul.f32 %v242, %v1031
        %v1036 = vmul.f32 %v243, %v1031
        %v1037 = vmul.f32 %v244, %v1031
        %v1038 = vmul.f32 %v245, %v1031
        %v1039 = vmul.f32 %v246, %v1031
        %v1040 = vmul.f32 %v247, %v1031
        %v1041 = vmul.f32 %v248, %v1031
        %v1042 = vmul.f32 %v249, %v1031
        %v1043 = vmul.f32 %v250, %v1031
        %v1044 = vmul.f32 %v251, %v1031
        %v1045 = vmul.f32 %v252, %v1031
        %v1046 = vmul.f32 %v253, %v1031
        %v1047 = vmul.f32 %v254, %v1031
        %v1048 = vpack.c.bf16 %v1033, %v1032
        %v1049 = vpack.c.bf16 %v1035, %v1034
        %v1050 = vpack.c.bf16 %v1037, %v1036
        %v1051 = vpack.c.bf16 %v1039, %v1038
        %v1052 = vpack.c.bf16 %v1041, %v1040
        %v1053 = vpack.c.bf16 %v1043, %v1042
        %v1054 = vpack.c.bf16 %v1045, %v1044
        %v1055 = vpack.c.bf16 %v1047, %v1046
        %v1057 = vsel %vm320, %v1048, 0
        %v1060 = vsel %vm320, %v1049, 0
        %v1063 = vsel %vm320, %v1050, 0
        %v1066 = vsel %vm320, %v1051, 0
        %v1069 = vsel %vm320, %v1052, 0
        %v1072 = vsel %vm320, %v1053, 0
        %v1075 = vsel %vm320, %v1054, 0
        %v1078 = vsel %vm320, %v1055, 0
        %1080 = vmatpush.bf16.msra.mxu0 0
        %1081 = vmatpush.bf16.msra.mxu0 0
        %1082 = vmatpush.bf16.msra.mxu0 0
        %1083 = vmatpush.bf16.msra.mxu0 0
        %1084 = vmatpush.bf16.msra.mxu0 %v310
        %1085 = vmatpush.bf16.msra.mxu0 %v308
        %1086 = vmatpush.bf16.msra.mxu0 %v306
        %1087 = vmatpush.bf16.msra.mxu0 %v304
        %1088 = vmatmul.bf16.gmra.mxu0 %v1057
        %v1089 = vpop.f32.mrf.mxu0
        %v1090 = vadd.f32 0.0, %v1089
        %v1091 = vpop.f32.mrf.mxu0
        %v1092 = vadd.f32 0.0, %v1091
        %1093 = vmatmul.bf16.gmra.mxu0 %v1060
        %v1094 = vpop.f32.mrf.mxu0
        %v1095 = vadd.f32 0.0, %v1094
        %v1096 = vpop.f32.mrf.mxu0
        %v1097 = vadd.f32 0.0, %v1096
        %1098 = vmatmul.bf16.gmra.mxu0 %v1063
        %v1099 = vpop.f32.mrf.mxu0
        %v1100 = vadd.f32 0.0, %v1099
        %v1101 = vpop.f32.mrf.mxu0
        %v1102 = vadd.f32 0.0, %v1101
        %1103 = vmatmul.bf16.gmra.mxu0 %v1066
        %v1104 = vpop.f32.mrf.mxu0
        %v1105 = vadd.f32 0.0, %v1104
        %v1106 = vpop.f32.mrf.mxu0
        %v1107 = vadd.f32 0.0, %v1106
        %1108 = vmatmul.bf16.gmra.mxu0 %v1069
        %v1109 = vpop.f32.mrf.mxu0
        %v1110 = vadd.f32 0.0, %v1109
        %v1111 = vpop.f32.mrf.mxu0
        %v1112 = vadd.f32 0.0, %v1111
        %1113 = vmatmul.bf16.gmra.mxu0 %v1072
        %v1114 = vpop.f32.mrf.mxu0
        %v1115 = vadd.f32 0.0, %v1114
        %v1116 = vpop.f32.mrf.mxu0
        %v1117 = vadd.f32 0.0, %v1116
        %1118 = vmatmul.bf16.gmra.mxu0 %v1075
        %v1119 = vpop.f32.mrf.mxu0
        %v1120 = vadd.f32 0.0, %v1119
        %v1121 = vpop.f32.mrf.mxu0
        %v1122 = vadd.f32 0.0, %v1121
        %1123 = vmatmul.bf16.gmra.mxu0 %v1078
        %v1124 = vpop.f32.mrf.mxu0
        %v1125 = vadd.f32 0.0, %v1124
        %v1126 = vpop.f32.mrf.mxu0
        %v1127 = vadd.f32 0.0, %v1126
        %1128 = vdwg.mxu0
        %1129 = vmatpush.bf16.msra.mxu0 0
        %1130 = vmatpush.bf16.msra.mxu0 0
        %1131 = vmatpush.bf16.msra.mxu0 0
        %1132 = vmatpush.bf16.msra.mxu0 0
        %1133 = vmatpush.bf16.msra.mxu0 %v311
        %1134 = vmatpush.bf16.msra.mxu0 %v309
        %1135 = vmatpush.bf16.msra.mxu0 %v307
        %1136 = vmatpush.bf16.msra.mxu0 %v305
        %1137 = vmatmul.bf16.gmra.mxu0 %v1057
        %v1138 = vpop.f32.mrf.mxu0
        %v1139 = vadd.f32 0.0, %v1138
        %v1140 = vpop.f32.mrf.mxu0
        %v1141 = vadd.f32 0.0, %v1140
        %1142 = vmatmul.bf16.gmra.mxu0 %v1060
        %v1143 = vpop.f32.mrf.mxu0
        %v1144 = vadd.f32 0.0, %v1143
        %v1145 = vpop.f32.mrf.mxu0
        %v1146 = vadd.f32 0.0, %v1145
        %1147 = vmatmul.bf16.gmra.mxu0 %v1063
        %v1148 = vpop.f32.mrf.mxu0
        %v1149 = vadd.f32 0.0, %v1148
        %v1150 = vpop.f32.mrf.mxu0
        %v1151 = vadd.f32 0.0, %v1150
        %1152 = vmatmul.bf16.gmra.mxu0 %v1066
        %v1153 = vpop.f32.mrf.mxu0
        %v1154 = vadd.f32 0.0, %v1153
        %v1155 = vpop.f32.mrf.mxu0
        %v1156 = vadd.f32 0.0, %v1155
        %1157 = vmatmul.bf16.gmra.mxu0 %v1069
        %v1158 = vpop.f32.mrf.mxu0
        %v1159 = vadd.f32 0.0, %v1158
        %v1160 = vpop.f32.mrf.mxu0
        %v1161 = vadd.f32 0.0, %v1160
        %1162 = vmatmul.bf16.gmra.mxu0 %v1072
        %v1163 = vpop.f32.mrf.mxu0
        %v1164 = vadd.f32 0.0, %v1163
        %v1165 = vpop.f32.mrf.mxu0
        %v1166 = vadd.f32 0.0, %v1165
        %1167 = vmatmul.bf16.gmra.mxu0 %v1075
        %v1168 = vpop.f32.mrf.mxu0
        %v1169 = vadd.f32 0.0, %v1168
        %v1170 = vpop.f32.mrf.mxu0
        %v1171 = vadd.f32 0.0, %v1170
        %1172 = vmatmul.bf16.gmra.mxu0 %v1078
        %v1173 = vpop.f32.mrf.mxu0
        %v1174 = vadd.f32 0.0, %v1173
        %v1175 = vpop.f32.mrf.mxu0
        %v1176 = vadd.f32 0.0, %v1175
        %1177 = vdwg.mxu0
        %v1178 = vmul.f32 %v1090, 0.2
        %v1179 = vmul.f32 %v1139, 0.2
        %v1180 = vmul.f32 %v1092, 0.2
        %v1181 = vmul.f32 %v1141, 0.2
        %v1182 = vmul.f32 %v1095, 0.2
        %v1183 = vmul.f32 %v1144, 0.2
        %v1184 = vmul.f32 %v1097, 0.2
        %v1185 = vmul.f32 %v1146, 0.2
        %v1186 = vmul.f32 %v1100, 0.2
        %v1187 = vmul.f32 %v1149, 0.2
        %v1188 = vmul.f32 %v1102, 0.2
        %v1189 = vmul.f32 %v1151, 0.2
        %v1190 = vmul.f32 %v1105, 0.2
        %v1191 = vmul.f32 %v1154, 0.2
        %v1192 = vmul.f32 %v1107, 0.2
        %v1193 = vmul.f32 %v1156, 0.2
        %v1194 = vmul.f32 %v1110, 0.2
        %v1195 = vmul.f32 %v1159, 0.2
        %v1196 = vmul.f32 %v1112, 0.2
        %v1197 = vmul.f32 %v1161, 0.2
        %v1198 = vmul.f32 %v1115, 0.2
        %v1199 = vmul.f32 %v1164, 0.2
        %v1200 = vmul.f32 %v1117, 0.2
        %v1201 = vmul.f32 %v1166, 0.2
        %v1202 = vmul.f32 %v1120, 0.2
        %v1203 = vmul.f32 %v1169, 0.2
        %v1204 = vmul.f32 %v1122, 0.2
        %v1205 = vmul.f32 %v1171, 0.2
        %v1206 = vmul.f32 %v1125, 0.2
        %v1207 = vmul.f32 %v1174, 0.2
        %v1208 = vmul.f32 %v1127, 0.2
        %v1209 = vmul.f32 %v1176, 0.2
        %v1210 = vmax.f32 %v1090, %v1178
        %v1211 = vmax.f32 %v1139, %v1179
        %v1212 = vmax.f32 %v1092, %v1180
        %v1213 = vmax.f32 %v1141, %v1181
        %v1214 = vmax.f32 %v1095, %v1182
        %v1215 = vmax.f32 %v1144, %v1183
        %v1216 = vmax.f32 %v1097, %v1184
        %v1217 = vmax.f32 %v1146, %v1185
        %v1218 = vmax.f32 %v1100, %v1186
        %v1219 = vmax.f32 %v1149, %v1187
        %v1220 = vmax.f32 %v1102, %v1188
        %v1221 = vmax.f32 %v1151, %v1189
        %v1222 = vmax.f32 %v1105, %v1190
        %v1223 = vmax.f32 %v1154, %v1191
        %v1224 = vmax.f32 %v1107, %v1192
        %v1225 = vmax.f32 %v1156, %v1193
        %v1226 = vmax.f32 %v1110, %v1194
        %v1227 = vmax.f32 %v1159, %v1195
        %v1228 = vmax.f32 %v1112, %v1196
        %v1229 = vmax.f32 %v1161, %v1197
        %v1230 = vmax.f32 %v1115, %v1198
        %v1231 = vmax.f32 %v1164, %v1199
        %v1232 = vmax.f32 %v1117, %v1200
        %v1233 = vmax.f32 %v1166, %v1201
        %v1234 = vmax.f32 %v1120, %v1202
        %v1235 = vmax.f32 %v1169, %v1203
        %v1236 = vmax.f32 %v1122, %v1204
        %v1237 = vmax.f32 %v1171, %v1205
        %v1238 = vmax.f32 %v1125, %v1206
        %v1239 = vmax.f32 %v1174, %v1207
        %v1240 = vmax.f32 %v1127, %v1208
        %v1241 = vmax.f32 %v1176, %v1209
        %v1242 = vadd.f32 %v998, %v1210
        %v1243 = vadd.f32 %v999, %v1211
        %v1244 = vadd.f32 %v1000, %v1212
        %v1245 = vadd.f32 %v1001, %v1213
        %v1246 = vadd.f32 %v1002, %v1214
        %v1247 = vadd.f32 %v1003, %v1215
        %v1248 = vadd.f32 %v1004, %v1216
        %v1249 = vadd.f32 %v1005, %v1217
        %v1250 = vadd.f32 %v1006, %v1218
        %v1251 = vadd.f32 %v1007, %v1219
        %v1252 = vadd.f32 %v1008, %v1220
        %v1253 = vadd.f32 %v1009, %v1221
        %v1254 = vadd.f32 %v1010, %v1222
        %v1255 = vadd.f32 %v1011, %v1223
        %v1256 = vadd.f32 %v1012, %v1224
        %v1257 = vadd.f32 %v1013, %v1225
        %v1258 = vadd.f32 %v1014, %v1226
        %v1259 = vadd.f32 %v1015, %v1227
        %v1260 = vadd.f32 %v1016, %v1228
        %v1261 = vadd.f32 %v1017, %v1229
        %v1262 = vadd.f32 %v1018, %v1230
        %v1263 = vadd.f32 %v1019, %v1231
        %v1264 = vadd.f32 %v1020, %v1232
        %v1265 = vadd.f32 %v1021, %v1233
        %v1266 = vadd.f32 %v1022, %v1234
        %v1267 = vadd.f32 %v1023, %v1235
        %v1268 = vadd.f32 %v1024, %v1236
        %v1269 = vadd.f32 %v1025, %v1237
        %v1270 = vadd.f32 %v1026, %v1238
        %v1271 = vadd.f32 %v1027, %v1239
        %v1272 = vadd.f32 %v1028, %v1240
        %v1273 = vadd.f32 %v1029, %v1241
        %1274 = vst [vmem:[%s194] sm:$0xff] %v1242
        %1275 = vst [vmem:[%s194 + $0x8] sm:$0xff] %v1243
        %1276 = vst [vmem:[%s194 + $0x10] sm:$0xff] %v1244
        %1277 = vst [vmem:[%s194 + $0x18] sm:$0xff] %v1245
        %1278 = vst [vmem:[%s194 + $0x20] sm:$0xff] %v1246
        %1279 = vst [vmem:[%s194 + $0x28] sm:$0xff] %v1247
        %1280 = vst [vmem:[%s194 + $0x30] sm:$0xff] %v1248
        %1281 = vst [vmem:[%s194 + $0x38] sm:$0xff] %v1249
        %1282 = vst [vmem:[%s194 + $0x40] sm:$0xff] %v1250
        %1283 = vst [vmem:[%s194 + $0x48] sm:$0xff] %v1251
        %1284 = vst [vmem:[%s194 + $0x50] sm:$0xff] %v1252
        %1285 = vst [vmem:[%s194 + $0x58] sm:$0xff] %v1253
        %1286 = vst [vmem:[%s194 + $0x60] sm:$0xff] %v1254
        %1287 = vst [vmem:[%s194 + $0x68] sm:$0xff] %v1255
        %1288 = vst [vmem:[%s194 + $0x70] sm:$0xff] %v1256
        %1289 = vst [vmem:[%s194 + $0x78] sm:$0xff] %v1257
        %1290 = vst [vmem:[%s194 + $0x80] sm:$0xff] %v1258
        %1291 = vst [vmem:[%s194 + $0x88] sm:$0xff] %v1259
        %1292 = vst [vmem:[%s194 + $0x90] sm:$0xff] %v1260
        %1293 = vst [vmem:[%s194 + $0x98] sm:$0xff] %v1261
        %1294 = vst [vmem:[%s194 + $0xa0] sm:$0xff] %v1262
        %1295 = vst [vmem:[%s194 + $0xa8] sm:$0xff] %v1263
        %1296 = vst [vmem:[%s194 + $0xb0] sm:$0xff] %v1264
        %1297 = vst [vmem:[%s194 + $0xb8] sm:$0xff] %v1265
        %1298 = vst [vmem:[%s194 + $0xc0] sm:$0xff] %v1266
        %1299 = vst [vmem:[%s194 + $0xc8] sm:$0xff] %v1267
        %1300 = vst [vmem:[%s194 + $0xd0] sm:$0xff] %v1268
        %1301 = vst [vmem:[%s194 + $0xd8] sm:$0xff] %v1269
        %1302 = vst [vmem:[%s194 + $0xe0] sm:$0xff] %v1270
        %1303 = vst [vmem:[%s194 + $0xe8] sm:$0xff] %v1271
        %1304 = vst [vmem:[%s194 + $0xf0] sm:$0xff] %v1272
        %1305 = vst [vmem:[%s194 + $0xf8] sm:$0xff] %v1273
        %s1306 = sand.u32 %s112, 1
        %s1307 = scalar_lea.sflag [#allocation3], %s1306
        %s1308 = sand.u32 %s112, 1
        %s1309 = smul.addr %s1308, 256
        %s1310 = scalar_lea.vmem [#allocation2], %s1309
        // Predicated region
        $region33: #{tpu_custom_call.1} parent=31 // pred_check
          %p1311 = pneg %p122
        $region34: #{tpu_custom_call.1} parent=31 // pred_check_branch
          %1313 = sbr.rel (%p1311) target = $region36
        $region35: #{tpu_custom_call.1} parent=31 // pred_region
          %s1314 = smul.u32 16, %s21
          %s1315 = smul.u32 2, %s22
          %1317 = vsyncadd %s1307, 0
          %s1318 = smul.addr %s1314, 2
          %s1319 = sadd.s32 %s1315, %s1318
          %s1320 = smul.addr %s1319, 8
          %s1321 = scalar_lea.hbm %s3, %s1320
          %s1322 = sshll.u32 %s1310, 4
          %s1323 = int_to_ptr.vmem [resolvable:$true] %s1322
          %s1324 = sshll.u32 %s1321, 4
          %s1325 = int_to_ptr.hbm [resolvable:$true] %s1324
          %1330 = dma.vmem_to_hbm [thread:$0]  %s1323, 4096, %s1325, %s1307, 256, 256, 16
        $region36: #{tpu_custom_call.1} parent=31 // pred_fallthru
          _
      $region32: #{tpu_custom_call.1} parent=5 // pred_fallthru
        _
      %p1331 = scmp.le.s32.totalorder 2, %s12
      // Predicated region
      $region37: #{tpu_custom_call.1} parent=5 // pred_check
        %p1332 = pneg %p1331
      $region38: #{tpu_custom_call.1} parent=5 // pred_check_branch
        %1334 = sbr.rel (%p1332) target = $region40
      $region39: #{tpu_custom_call.1} parent=5 // pred_region
        %s1335 = ssub.s32 %s12, 2
        // Predicated region
        $region41: #{tpu_custom_call.1} parent=39 // pred_check
          %p1336 = pneg %p128
        $region42: #{tpu_custom_call.1} parent=39 // pred_check_branch
          %1338 = sbr.rel (%p1336) target = $region44
        $region43: #{tpu_custom_call.1} parent=39 // pred_region
          %s1339 = sand.u32 %s113, 1
          %s1340 = scalar_lea.sflag [#allocation3], %s1339
          %s1341 = sand.u32 %s113, 1
          %s1342 = smul.addr %s1341, 256
          %s1343 = scalar_lea.vmem [#allocation2], %s1342
          %1345 = dma.done %s1340, 4096
        $region44: #{tpu_custom_call.1} parent=39 // pred_fallthru
          _
      $region40: #{tpu_custom_call.1} parent=5 // pred_fallthru
        _
    $region6: #{tpu_custom_call.1} parent=1 // loop_footer
      %s16 = sadd.s32 1, %s12
    $region7: #{tpu_custom_call.1} parent=1 // loop_footer_branch
      %11 = sbr.rel target = $region3
    $region8: #{tpu_custom_call.1} parent=1 // loop_exit
      _
    %1346 = vsyncpa [#allocation3], 1
    %s1347 = scalar_lea.sflag [#allocation3], 1
    %1348 = vsyncpa %s1347, 1

</llo_original>
